<compile_context>
chip_gen: v7x
topology: tpu7x:2x2x1
jax: 0.10.0
libtpu: 0.0.40
codegen_flags: <defaults>
</compile_context>

<pallas_src>
import functools

import jax
import jax.numpy as jnp
from jax.experimental import pallas as pl
from jax.experimental.pallas import tpu as pltpu

_NEG_LARGE = -1e30  # effectively -inf for padded vocab lanes, but NaN-safe


def _round_up(x, m):
    return (x + m - 1) // m * m


def _cdiv(a, b):
    return (a + b - 1) // b


def _vmem_limit_bytes():
    """Generation-aware VMEM budget (~100 MiB on v5e/v6e, ~50 MiB on v7x)."""
    cap = 64 * 1024 * 1024  # conservative fallback = v7x per-TC VMEM
    try:
        cap = int(pltpu.get_tpu_info().vmem_capacity_bytes)
    except Exception:
        pass
    return min(int(cap * 0.78), 100 * 1024 * 1024)


def _proj_cached_kernel(x_ref, w_ref, b_ref, o_ref, cache_ref, m_ref, l_ref):
    """Fused linear + log_softmax with a VMEM logits cache (single matmul).

    Grid: (row_tiles, pass, vocab_tiles), iterated row-tile outer, then pass,
    then vocab tile.
      pass 0: logits = x @ W_tile + b_tile, stored into cache_ref[j]; online
              (running max, sum-of-exp) reduction into (tm, 1) scratch.
      pass 1: read cache_ref[j], write logits - logsumexp (no matmul, and the
              W window is parked so no weight DMA happens in this pass).

    NOTE: the output index map (i, j*p) parks the output window on block
    (i, 0) during pass 0.  Pallas only flushes an output block when its block
    index changes, so no unwritten block is ever written back to HBM — but
    this depends on the exact grid order above and on only the row axis being
    megacore-sharded ("parallel").  Do not reorder the grid axes.
    """
    p = pl.program_id(1)
    j = pl.program_id(2)
    nj = pl.num_programs(2)

    @pl.when((p == 0) & (j == 0))
    def _init():
        m_ref[...] = jnp.full_like(m_ref, -jnp.inf)
        l_ref[...] = jnp.zeros_like(l_ref)

    @pl.when(p == 0)
    def _compute_and_reduce():
        logits = jnp.dot(
            x_ref[...].astype(jnp.bfloat16), w_ref[...],
            preferred_element_type=jnp.float32,
        ) + b_ref[j]
        cache_ref[j] = logits
        m_prev = m_ref[...]
        m_new = jnp.maximum(m_prev, jnp.max(logits, axis=-1, keepdims=True))
        l_ref[...] = (
            l_ref[...] * jnp.exp(m_prev - m_new)
            + jnp.sum(jnp.exp(logits - m_new), axis=-1, keepdims=True)
        )
        m_ref[...] = m_new

    @pl.when((p == 0) & (j == nj - 1))
    def _finalize():
        # Fold running (max, sum-of-exp) into the per-row log-sum-exp.
        m_ref[...] = m_ref[...] + jnp.log(l_ref[...])

    @pl.when(p == 1)
    def _write():
        o_ref[...] = (cache_ref[j] - m_ref[...]).astype(o_ref.dtype)


def _proj_recompute_kernel(x_ref, w_ref, b_ref, o_ref, m_ref, l_ref):
    """Fallback when the (tm, v_p) logits cache does not fit VMEM: recompute
    the logits tile in pass 1 (two weight streams / two matmuls per row tile).
    Same grid / output-parking contract as the cached kernel."""
    p = pl.program_id(1)
    j = pl.program_id(2)
    nj = pl.num_programs(2)

    logits = jnp.dot(
        x_ref[...].astype(jnp.bfloat16), w_ref[...],
        preferred_element_type=jnp.float32,
    ) + b_ref[j]

    @pl.when((p == 0) & (j == 0))
    def _init():
        m_ref[...] = jnp.full_like(m_ref, -jnp.inf)
        l_ref[...] = jnp.zeros_like(l_ref)

    @pl.when(p == 0)
    def _reduce():
        m_prev = m_ref[...]
        m_new = jnp.maximum(m_prev, jnp.max(logits, axis=-1, keepdims=True))
        l_ref[...] = (
            l_ref[...] * jnp.exp(m_prev - m_new)
            + jnp.sum(jnp.exp(logits - m_new), axis=-1, keepdims=True)
        )
        m_ref[...] = m_new

    @pl.when((p == 0) & (j == nj - 1))
    def _finalize():
        m_ref[...] = m_ref[...] + jnp.log(l_ref[...])

    @pl.when(p == 1)
    def _write():
        o_ref[...] = (logits - m_ref[...]).astype(o_ref.dtype)


def prepare_projection_params(weight, bias):
    """One-time prep outside the per-call path: transpose + bf16-cast weight."""
    w_t = jnp.asarray(weight).T.astype(jnp.bfloat16)  # (d_model, vocab)
    b = jnp.asarray(bias).astype(jnp.float32)         # (vocab,)
    return w_t, b


@functools.partial(
    jax.jit, static_argnames=("tm", "tn", "out_dtype", "use_logits_cache")
)
def projection_layer(x, w_t, bias, *, tm=512, tn=512, out_dtype=jnp.float32,
                     use_logits_cache=None):
    """log_softmax(x @ W^T + b) along the vocab axis.

    x:    (B, S, d_model)   activations (any float dtype; cast to bf16 in-kernel)
    w_t:  (d_model, vocab)  weight, already transposed (prepare_projection_params)
    bias: (vocab,)          f32 bias
    use_logits_cache: None = auto (cache when it fits VMEM), True/False forces.
    """
    B, S, D = x.shape
    Dw, V = w_t.shape
    assert D == Dw, "d_model mismatch between x and weight"
    assert V > 0
    rows = B * S

    x_itemsize = jnp.dtype(x.dtype).itemsize
    out_itemsize = jnp.dtype(out_dtype).itemsize
    if jnp.dtype(out_dtype) == jnp.dtype(jnp.float16):
        # -1e30 padded-lane bias would overflow fp16; padded lanes are sliced
        # off, but disallow to keep things obviously safe.
        raise ValueError("use float32 or bfloat16 for out_dtype")

    # --- tile picking (VMEM-aware, generation-aware) -------------------------
    vmem_limit = _vmem_limit_bytes()
    tile_budget = int(vmem_limit * 0.9)

    tn_eff = _round_up(min(tn, _round_up(V, 128)), 128)   # lane-dense
    tm_eff = _round_up(min(tm, _round_up(rows, 16)), 16)  # bf16 sublane multiple
    # v7x has 2 TensorCores: keep >= 2 row tiles when rows allow it, without
    # dropping effective arithmetic intensity (keep tm >= 256).
    if rows >= 512 and _cdiv(rows, tm_eff) < 2:
        tm_eff = max(256, _round_up(_cdiv(rows, 2), 16))

    def _footprint(tm_, tn_, with_cache):
        v_p_ = _round_up(V, tn_)
        fp = (2 * tm_ * D * x_itemsize        # x tile (double-buffered)
              + 2 * D * tn_ * 2               # bf16 W tile (double-buffered)
              + 2 * v_p_ * 4                  # resident f32 bias
              + 2 * tm_ * tn_ * out_itemsize  # out tile (double-buffered)
              + 2 * tm_ * 4)                  # (m, l) scratch
        if with_cache:
            fp += tm_ * v_p_ * 4              # f32 logits cache
        return fp

    # Shrink tn, then tm, until the non-cached footprint fits the budget.
    # (For very large D a K-tiled accumulator would be preferable to shrinking
    # tn; not needed at these sizes.)
    while _footprint(tm_eff, tn_eff, False) > tile_budget and tn_eff > 128:
        tn_eff = max(128, _round_up(tn_eff // 2, 128))
    while _footprint(tm_eff, tn_eff, False) > tile_budget and tm_eff > 16:
        tm_eff = max(16, _round_up(tm_eff // 2, 16))

    use_cache = use_logits_cache
    if use_cache is None:
        use_cache = _footprint(tm_eff, tn_eff, True) <= tile_budget

    v_p = _round_up(V, tn_eff)
    rows_p = _round_up(rows, tm_eff)
    n_row_tiles = rows_p // tm_eff
    n_vocab_tiles = v_p // tn_eff

    # --- operand prep (no wrapper-side dtype cast of x; the kernel casts) ----
    x2d = x.reshape(rows, D)
    if rows_p != rows:
        x2d = jnp.pad(x2d, ((0, rows_p - rows), (0, 0)))
    w2d = w_t.astype(jnp.bfloat16)
    b2d = bias.astype(jnp.float32).reshape(1, V)
    if v_p != V:
        # Padded vocab lanes get a huge negative bias so they drop out of the
        # max / sum-of-exp with no in-kernel masking; padded lanes are sliced
        # off before returning.  Padding is always trailing (keeps the first
        # vocab tile non-degenerate, so the online LSE never sees all -inf).
        w2d = jnp.pad(w2d, ((0, 0), (0, v_p - V)))
        b2d = jnp.pad(b2d, ((0, 0), (0, v_p - V)), constant_values=_NEG_LARGE)
    # Resident bias, indexed by leading vocab-tile axis inside the kernel.
    b3d = b2d.reshape(n_vocab_tiles, 1, tn_eff)

    n_matmul_passes = 1 if use_cache else 2
    cost = pl.CostEstimate(
        flops=2 * n_matmul_passes * rows_p * D * v_p,
        transcendentals=rows_p * v_p,
        bytes_accessed=(
            x2d.size * x_itemsize
            + n_matmul_passes * n_row_tiles * w2d.size * 2   # bf16 weight stream
            + rows_p * v_p * out_itemsize
        ),
    )

    if use_cache:
        kernel = _proj_cached_kernel
        # Park the W window on the last vocab block during pass 1 (it is not
        # read there) so the weight is streamed from HBM exactly once per row
        # tile.
        w_map = lambda i, p, j: (0, j * (1 - p) + (n_vocab_tiles - 1) * p)
        scratch = [
            pltpu.VMEM((n_vocab_tiles, tm_eff, tn_eff), jnp.float32),  # logits
            pltpu.VMEM((tm_eff, 1), jnp.float32),  # running max -> LSE
            pltpu.VMEM((tm_eff, 1), jnp.float32),  # running sum-of-exp
        ]
    else:
        kernel = _proj_recompute_kernel
        w_map = lambda i, p, j: (0, j)             # weight needed in both passes
        scratch = [
            pltpu.VMEM((tm_eff, 1), jnp.float32),
            pltpu.VMEM((tm_eff, 1), jnp.float32),
        ]

    out2d = pl.pallas_call(
        kernel,
        out_shape=jax.ShapeDtypeStruct((rows_p, v_p), out_dtype),
        grid_spec=pltpu.PrefetchScalarGridSpec(
            num_scalar_prefetch=0,
            grid=(n_row_tiles, 2, n_vocab_tiles),  # rows | pass | vocab
            in_specs=[
                pl.BlockSpec((tm_eff, D), lambda i, p, j: (i, 0)),        # x rows
                pl.BlockSpec((D, tn_eff), w_map),                         # W tile
                pl.BlockSpec((n_vocab_tiles, 1, tn_eff),
                             lambda i, p, j: (0, 0, 0)),                  # bias (resident)
            ],
            # Park the output window on (i, 0) during the reduction pass so no
            # garbage blocks are flushed; the write pass visits (i, j).
            out_specs=pl.BlockSpec((tm_eff, tn_eff), lambda i, p, j: (i, j * p)),
            scratch_shapes=scratch,
        ),
        compiler_params=pltpu.CompilerParams(
            dimension_semantics=("parallel", "arbitrary", "arbitrary"),
            vmem_limit_bytes=vmem_limit,
        ),
        cost_estimate=cost,
    )(x2d, w2d, b3d)

    return out2d[:rows, :V].reshape(B, S, V)


if __name__ == "__main__":
    # Small, deterministic configuration. vocab_size is deliberately not a
    # multiple of 128 so the ragged-vocab padding path is exercised.
    batch, seq, d_model, vocab_size = 2, 8, 32, 320

    key = jax.random.PRNGKey(0)
    kx, kw, kb = jax.random.split(key, 3)

    # Deterministic synthetic parameters (match nn.Linear's uniform init bound).
    bound = 1.0 / (d_model ** 0.5)
    weight = jax.random.uniform(
        kw, (vocab_size, d_model), jnp.float32, minval=-bound, maxval=bound
    )  # PyTorch (vocab, d_model) layout
    bias = jax.random.uniform(
        kb, (vocab_size,), jnp.float32, minval=-bound, maxval=bound
    )
    x = jax.random.normal(kx, (batch, seq, d_model), jnp.float32)

    # One-time transpose + cast, outside the per-call path.
    w_t, b = prepare_projection_params(weight, bias)

    # Small tiles so the multi-vocab-tile streaming path is exercised at toy
    # sizes; exercise both the cached (auto) and the recompute fallback paths.
    out = projection_layer(x, w_t, b, tm=128, tn=128)
    out_nc = projection_layer(x, w_t, b, tm=128, tn=128, use_logits_cache=False)
    out = jax.block_until_ready(out)
    out_nc = jax.block_until_ready(out_nc)
    assert out.shape == (batch, seq, vocab_size)

    # Both code paths must agree (same f32 logits / same reduction).
    assert jnp.allclose(out, out_nc, atol=1e-5, rtol=1e-5), float(
        jnp.max(jnp.abs(out - out_nc))
    )

    # Reference with the same bf16-matmul / f32-accumulate precision as the kernel.
    logits_ref = jnp.dot(
        x.astype(jnp.bfloat16).reshape(-1, d_model), w_t,
        preferred_element_type=jnp.float32,
    ) + bias
    ref = jax.nn.log_softmax(logits_ref, axis=-1).reshape(batch, seq, vocab_size)
    assert jnp.allclose(out, ref, atol=1e-3, rtol=1e-3), float(
        jnp.max(jnp.abs(out - ref))
    )

    # Looser check against the pure-f32 PyTorch-equivalent reference.
    ref32 = jax.nn.log_softmax(x @ weight.T + bias, axis=-1)
    assert jnp.allclose(out, ref32, atol=5e-2), float(jnp.max(jnp.abs(out - ref32)))

    # log_softmax rows should sum (in prob space) to ~1.
    assert jnp.allclose(jnp.sum(jnp.exp(out), axis=-1), 1.0, atol=1e-3)

    print("KERNEL_OK")
</pallas_src>

<mosaic_0001>
module attributes {stable_mosaic.version = 11 : i64} {
  func.func @_proj_cached_kernel(%arg0: i32, %arg1: i32, %arg2: i32, %arg3: memref<16x32xf32, #tpu.memory_space<vmem>>, %arg4: memref<32x128xbf16, #tpu.memory_space<vmem>>, %arg5: memref<3x1x128xf32, #tpu.memory_space<vmem>>, %arg6: memref<16x128xf32, #tpu.memory_space<vmem>>, %arg7: memref<3x16x128xf32, #tpu.memory_space<vmem>>, %arg8: memref<16x1xf32, #tpu.memory_space<vmem>>, %arg9: memref<16x1xf32, #tpu.memory_space<vmem>>) attributes {dimension_semantics = [#tpu.dimension_semantics<parallel>, #tpu.dimension_semantics<arbitrary>, #tpu.dimension_semantics<arbitrary>], iteration_bounds = array<i64: 1, 2, 3>, scalar_prefetch = 0 : i64, scratch_operands = 3 : i64, tpu.core_type = #tpu.core_type<tc>, window_params = [{transform_indices = @transform_0, window_bounds = array<i64: 16, 32>}, {transform_indices = @transform_1, window_bounds = array<i64: 32, 128>}, {pipeline_mode = #tpu.pipeline_mode<synchronous>, transform_indices = @transform_2, window_bounds = array<i64: 3, 1, 128>}, {transform_indices = @transform_3, window_bounds = array<i64: 16, 128>}]} {
    %c0_i32 = arith.constant 0 : i32
    %0 = arith.cmpi eq, %arg1, %c0_i32 : i32
    %c0_i32_0 = arith.constant 0 : i32
    %1 = arith.cmpi eq, %arg2, %c0_i32_0 : i32
    %2 = arith.andi %0, %1 : i1
    %3 = arith.extui %2 : i1 to i32
    %c0_i32_1 = arith.constant 0 : i32
    %4 = arith.cmpi ne, %3, %c0_i32_1 : i32
    scf.if %4 {
      %cst = arith.constant 0xFF800000 : f32
      %16 = vector.broadcast %cst : f32 to vector<16x1xf32>
      %c0 = arith.constant 0 : index
      %c0_7 = arith.constant 0 : index
      %17 = vector.load %arg8[%c0, %c0_7] : memref<16x1xf32, #tpu.memory_space<vmem>>, vector<16x1xf32>
      tpu.vector_store %arg8[%c0, %c0_7], %16 {strides = array<i32>} : memref<16x1xf32, #tpu.memory_space<vmem>>, vector<16x1xf32>,
      %cst_8 = arith.constant 0.000000e+00 : f32
      %18 = vector.broadcast %cst_8 : f32 to vector<16x1xf32>
      %c0_9 = arith.constant 0 : index
      %c0_10 = arith.constant 0 : index
      %19 = vector.load %arg9[%c0_9, %c0_10] : memref<16x1xf32, #tpu.memory_space<vmem>>, vector<16x1xf32>
      tpu.vector_store %arg9[%c0_9, %c0_10], %18 {strides = array<i32>} : memref<16x1xf32, #tpu.memory_space<vmem>>, vector<16x1xf32>,
    } else {
    }
    %c0_i32_2 = arith.constant 0 : i32
    %5 = arith.cmpi eq, %arg1, %c0_i32_2 : i32
    %6 = arith.extui %5 : i1 to i32
    %c0_i32_3 = arith.constant 0 : i32
    %7 = arith.cmpi ne, %6, %c0_i32_3 : i32
    scf.if %7 {
      %c0 = arith.constant 0 : index
      %c0_7 = arith.constant 0 : index
      %16 = vector.load %arg3[%c0, %c0_7] : memref<16x32xf32, #tpu.memory_space<vmem>>, vector<16x32xf32>
      %17 = arith.truncf %16 : vector<16x32xf32> to vector<16x32xbf16>
      %c0_8 = arith.constant 0 : index
      %c0_9 = arith.constant 0 : index
      %18 = vector.load %arg4[%c0_8, %c0_9] : memref<32x128xbf16, #tpu.memory_space<vmem>>, vector<32x128xbf16>
      %cst = arith.constant dense<0.000000e+00> : vector<16x128xf32>
      %19 = tpu.matmul %17, %18, %cst {dimension_numbers = #tpu.dot_dimension_numbers<[1], [0], [0], [1], [0, 0, 1, 1], [], []>} : vector<16x32xbf16>, vector<32x128xbf16>, vector<16x128xf32> -> vector<16x128xf32>
      %20 = arith.index_cast %arg2 : i32 to index
      %c0_10 = arith.constant 0 : index
      %c0_11 = arith.constant 0 : index
      %21 = vector.load %arg5[%20, %c0_10, %c0_11] : memref<3x1x128xf32, #tpu.memory_space<vmem>>, vector<1x1x128xf32>
      %22 = vector.shape_cast %21 : vector<1x1x128xf32> to vector<1x128xf32>
      %23 = vector.broadcast %22 : vector<1x128xf32> to vector<16x128xf32>
      %24 = arith.addf %19, %23 : vector<16x128xf32>
      %25 = arith.index_cast %arg2 : i32 to index
      %c0_12 = arith.constant 0 : index
      %c0_13 = arith.constant 0 : index
      %26 = vector.load %arg7[%25, %c0_12, %c0_13] : memref<3x16x128xf32, #tpu.memory_space<vmem>>, vector<1x16x128xf32>
      %27 = vector.shape_cast %26 : vector<1x16x128xf32> to vector<16x128xf32>
      %28 = vector.shape_cast %24 : vector<16x128xf32> to vector<1x16x128xf32>
      tpu.vector_store %arg7[%25, %c0_12, %c0_13], %28 {strides = array<i32>} : memref<3x16x128xf32, #tpu.memory_space<vmem>>, vector<1x16x128xf32>,
      %c0_14 = arith.constant 0 : index
      %c0_15 = arith.constant 0 : index
      %29 = vector.load %arg8[%c0_14, %c0_15] : memref<16x1xf32, #tpu.memory_space<vmem>>, vector<16x1xf32>
      %cst_16 = arith.constant dense<0xFF800000> : vector<16xf32>
      %30 = vector.multi_reduction <maximumf>, %24, %cst_16 [1] : vector<16x128xf32> to vector<16xf32>
      %31 = vector.shape_cast %30 : vector<16xf32> to vector<16x1xf32>
      %32 = arith.maximumf %29, %31 : vector<16x1xf32>
      %c0_17 = arith.constant 0 : index
      %c0_18 = arith.constant 0 : index
      %33 = vector.load %arg9[%c0_17, %c0_18] : memref<16x1xf32, #tpu.memory_space<vmem>>, vector<16x1xf32>
      %34 = arith.subf %29, %32 : vector<16x1xf32>
      %35 = math.exp %34 : vector<16x1xf32>
      %36 = arith.mulf %33, %35 : vector<16x1xf32>
      %37 = vector.broadcast %32 : vector<16x1xf32> to vector<16x128xf32>
      %38 = arith.subf %24, %37 : vector<16x128xf32>
      %39 = math.exp %38 : vector<16x128xf32>
      %cst_19 = arith.constant dense<0.000000e+00> : vector<16xf32>
      %40 = vector.multi_reduction <add>, %39, %cst_19 [1] : vector<16x128xf32> to vector<16xf32>
      %41 = vector.shape_cast %40 : vector<16xf32> to vector<16x1xf32>
      %42 = arith.addf %36, %41 : vector<16x1xf32>
      %c0_20 = arith.constant 0 : index
      %c0_21 = arith.constant 0 : index
      %43 = vector.load %arg9[%c0_20, %c0_21] : memref<16x1xf32, #tpu.memory_space<vmem>>, vector<16x1xf32>
      tpu.vector_store %arg9[%c0_20, %c0_21], %42 {strides = array<i32>} : memref<16x1xf32, #tpu.memory_space<vmem>>, vector<16x1xf32>,
      %c0_22 = arith.constant 0 : index
      %c0_23 = arith.constant 0 : index
      %44 = vector.load %arg8[%c0_22, %c0_23] : memref<16x1xf32, #tpu.memory_space<vmem>>, vector<16x1xf32>
      tpu.vector_store %arg8[%c0_22, %c0_23], %32 {strides = array<i32>} : memref<16x1xf32, #tpu.memory_space<vmem>>, vector<16x1xf32>,
    } else {
    }
    %c0_i32_4 = arith.constant 0 : i32
    %8 = arith.cmpi eq, %arg1, %c0_i32_4 : i32
    %c2_i32 = arith.constant 2 : i32
    %9 = arith.cmpi eq, %arg2, %c2_i32 : i32
    %10 = arith.andi %8, %9 : i1
    %11 = arith.extui %10 : i1 to i32
    %c0_i32_5 = arith.constant 0 : i32
    %12 = arith.cmpi ne, %11, %c0_i32_5 : i32
    scf.if %12 {
      %c0 = arith.constant 0 : index
      %c0_7 = arith.constant 0 : index
      %16 = vector.load %arg8[%c0, %c0_7] : memref<16x1xf32, #tpu.memory_space<vmem>>, vector<16x1xf32>
      %c0_8 = arith.constant 0 : index
      %c0_9 = arith.constant 0 : index
      %17 = vector.load %arg9[%c0_8, %c0_9] : memref<16x1xf32, #tpu.memory_space<vmem>>, vector<16x1xf32>
      %18 = math.log %17 : vector<16x1xf32>
      %19 = arith.addf %16, %18 : vector<16x1xf32>
      %c0_10 = arith.constant 0 : index
      %c0_11 = arith.constant 0 : index
      %20 = vector.load %arg8[%c0_10, %c0_11] : memref<16x1xf32, #tpu.memory_space<vmem>>, vector<16x1xf32>
      tpu.vector_store %arg8[%c0_10, %c0_11], %19 {strides = array<i32>} : memref<16x1xf32, #tpu.memory_space<vmem>>, vector<16x1xf32>,
    } else {
    }
    %c1_i32 = arith.constant 1 : i32
    %13 = arith.cmpi eq, %arg1, %c1_i32 : i32
    %14 = arith.extui %13 : i1 to i32
    %c0_i32_6 = arith.constant 0 : i32
    %15 = arith.cmpi ne, %14, %c0_i32_6 : i32
    scf.if %15 {
      %16 = arith.index_cast %arg2 : i32 to index
      %c0 = arith.constant 0 : index
      %c0_7 = arith.constant 0 : index
      %17 = vector.load %arg7[%16, %c0, %c0_7] : memref<3x16x128xf32, #tpu.memory_space<vmem>>, vector<1x16x128xf32>
      %18 = vector.shape_cast %17 : vector<1x16x128xf32> to vector<16x128xf32>
      %c0_8 = arith.constant 0 : index
      %c0_9 = arith.constant 0 : index
      %19 = vector.load %arg8[%c0_8, %c0_9] : memref<16x1xf32, #tpu.memory_space<vmem>>, vector<16x1xf32>
      %20 = vector.broadcast %19 : vector<16x1xf32> to vector<16x128xf32>
      %21 = arith.subf %18, %20 : vector<16x128xf32>
      %c0_10 = arith.constant 0 : index
      %c0_11 = arith.constant 0 : index
      %22 = vector.load %arg6[%c0_10, %c0_11] : memref<16x128xf32, #tpu.memory_space<vmem>>, vector<16x128xf32>
      tpu.vector_store %arg6[%c0_10, %c0_11], %21 {strides = array<i32>} : memref<16x128xf32, #tpu.memory_space<vmem>>, vector<16x128xf32>,
    } else {
    }
    return
  }
  func.func @transform_0(%arg0: i32, %arg1: i32, %arg2: i32) -> (i32, i32) {
    %c0_i32 = arith.constant 0 : i32
    %c0_i32_0 = arith.constant 0 : i32
    return %arg0, %c0_i32 : i32, i32
  }
  func.func @transform_1(%arg0: i32, %arg1: i32, %arg2: i32) -> (i32, i32) {
    %c1_i32 = arith.constant 1 : i32
    %0 = arith.subi %c1_i32, %arg1 : i32
    %1 = arith.muli %arg2, %0 : i32
    %c2_i32 = arith.constant 2 : i32
    %2 = arith.muli %c2_i32, %arg1 : i32
    %3 = arith.addi %1, %2 : i32
    %c0_i32 = arith.constant 0 : i32
    %c0_i32_0 = arith.constant 0 : i32
    return %c0_i32, %3 : i32, i32
  }
  func.func @transform_2(%arg0: i32, %arg1: i32, %arg2: i32) -> (i32, i32, i32) {
    %c0_i32 = arith.constant 0 : i32
    %c0_i32_0 = arith.constant 0 : i32
    %c0_i32_1 = arith.constant 0 : i32
    %c0_i32_2 = arith.constant 0 : i32
    return %c0_i32, %c0_i32_0, %c0_i32_1 : i32, i32, i32
  }
  func.func @transform_3(%arg0: i32, %arg1: i32, %arg2: i32) -> (i32, i32) {
    %0 = arith.muli %arg2, %arg1 : i32
    %c0_i32 = arith.constant 0 : i32
    return %arg0, %0 : i32, i32
  }
}

</mosaic_0001>

<llo_original>
// kernel: projection_layer.1
$region0: #{projection_layer.1}
  #allocation0 [shape = 'u32[]', space=smem, size = 0x4, offset = 0x4, fixed_abs, tag = 'smem constant byte address 0x4 - core index']
  #allocation1 [shape = 'u32[144,128]{1,0:T(1,128)}', space=vmem, size = 0x12000, scoped, tag = 'internal scratch']
  #allocation2 [shape = 'f32[3,16,128]{2,1,0:T(8,128)}', space=vmem, size = 0x6000, scoped, tag = 'scratch operand']
  #allocation3 [shape = 'f32[16,1]{1,0:T(8,128)}', space=vmem, size = 0x2000, scoped, tag = 'scratch operand']
  #allocation4 [shape = 'f32[16,1]{1,0:T(8,128)}', space=vmem, size = 0x2000, scoped, tag = 'scratch operand']
  %s0 = inlined_call_operand.vmem [shape: f32[16,32], index: 0, kind: input, shape index: {}]
  %s1 = inlined_call_operand.vmem [shape: bf16[32,384], index: 1, kind: input, shape index: {}]
  %s2 = inlined_call_operand.vmem [shape: f32[3,1,128], index: 2, kind: input, shape index: {}]
  %s3 = inlined_call_operand.vmem [shape: f32[16,384], index: 3, kind: output, shape index: {}]
  %s4 = sld [smem:[#allocation0]]
  $region136: #{projection_layer.1} parent=0
    _
  %s6 = ssub.s32 1, %s4
  %s7 = scalar_select 0, %s6, %s4
  $region1: #{projection_layer.1} parent=0
    #allocation5 [shape = 'u8[16384]{0}', space=vmem, size = 0x4000, scoped, tag = 'input window, operand 1']
    #allocation6 [shape = 'u8[16384]{0}', space=vmem, size = 0x4000, scoped, tag = 'output window, operand 0']
    loop: start=0, step=1, limit=8
    $region2: #{projection_layer.1} parent=1 // loop_pre_header
      _
    $region3: #{projection_layer.1} parent=1 // loop_header
      %s9 = sphi 0, %s13
      %p10 = scmp.ge.s32.totalorder %s9, 8
      %s16 = sphi 0, %s35
      %s17 = sphi 0, %s31
      %s18 = sphi 0, %s27
      %s19 = sphi 0, %s16
      %s20 = sphi 0, %s17
      %s21 = sphi 0, %s18
      %s22 = sphi 0, %s19
      %s23 = sphi 0, %s20
      %s24 = sphi 0, %s21
      %s38 = sphi 0, %s40
      %s41 = sphi 0, %s38
      %s42 = sphi 0, %s41
      %s58 = sphi 0, %s42
      %s72 = sphi 0, %s74
      %s75 = sphi 0, %s72
      %s76 = sphi 0, %s75
      %s92 = sphi 0, %s76
      %s96 = sphi 0, %s96
      %s98 = sphi 0, %s96
      %s99 = sphi 0, %s98
      %s113 = sphi 0, %s99
      %s123 = sphi 0, %s125
      %s126 = sphi 0, %s123
      %s127 = sphi 0, %s126
      %s143 = sphi 0, %s127
    $region4: #{projection_layer.1} parent=1 // loop_header_branch
      %12 = sbr.rel (%p10) target = $region8
    $region5: #{projection_layer.1} parent=1 // loop_body
      %s14 = ssub.s32 %s9, 1
      %s15 = ssub.s32 %s9, 2
      %s25 = sadd.s32 1, %s18
      %p26 = scmp.ge.s32.totalorder %s25, 3
      %s27 = scalar_select %p26, 0, %s25
      %s28 = sadd.s32 1, %s17
      %s29 = scalar_select %p26, %s28, %s17
      %p30 = scmp.ge.s32.totalorder %s29, 2
      %s31 = scalar_select %p30, 0, %s29
      %s32 = sadd.s32 1, %s16
      %s33 = scalar_select %p30, %s32, %s16
      %p34 = scmp.ge.s32.totalorder %s33, 1
      %s35 = scalar_select %p34, 0, %s33
      %s36 = ssub.s32 %s16, %s35
      %p37 = scmp.eq.s32.totalorder %s36, 0
      %s39 = sadd.s32 %s38, 1
      %s40 = scalar_select %p37, %s38, %s39
      %p43 = pneg %p37
      %p44 = scmp.eq.s32.totalorder %s9, 5
      %p45 = por %p43, %p44
      %p46 = scmp.ne.s32.totalorder %s38, %s41
      %p47 = scmp.eq.s32.totalorder %s9, 0
      %p48 = por %p46, %p47
      %p49 = scmp.ne.s32.totalorder %s38, %s41
      %p50 = scmp.eq.s32.totalorder %s14, 5
      %p51 = por %p49, %p50
      %p52 = scmp.ne.s32.totalorder %s41, %s42
      %p53 = scmp.eq.s32.totalorder %s14, 0
      %p54 = por %p52, %p53
      %p55 = scmp.ne.s32.totalorder %s41, %s42
      %p56 = scmp.eq.s32.totalorder %s15, 5
      %p57 = por %p55, %p56
      %p59 = scmp.ne.s32.totalorder %s42, %s58
      %p60 = scmp.eq.s32.totalorder %s15, 0
      %p61 = por %p59, %p60
      %s62 = ssub.s32 1, %s17
      %s63 = smul.u32 %s18, %s62
      %s64 = smul.u32 %s17, 2
      %s65 = sadd.s32 %s63, %s64
      %s66 = ssub.s32 1, %s31
      %s67 = smul.u32 %s27, %s66
      %s68 = smul.u32 %s31, 2
      %s69 = sadd.s32 %s67, %s68
      %s70 = ssub.s32 %s65, %s69
      %p71 = scmp.eq.s32.totalorder %s70, 0
      %s73 = sadd.s32 %s72, 1
      %s74 = scalar_select %p71, %s72, %s73
      %p77 = pneg %p71
      %p78 = scmp.eq.s32.totalorder %s9, 5
      %p79 = por %p77, %p78
      %p80 = scmp.ne.s32.totalorder %s72, %s75
      %p81 = scmp.eq.s32.totalorder %s9, 0
      %p82 = por %p80, %p81
      %p83 = scmp.ne.s32.totalorder %s72, %s75
      %p84 = scmp.eq.s32.totalorder %s14, 5
      %p85 = por %p83, %p84
      %p86 = scmp.ne.s32.totalorder %s75, %s76
      %p87 = scmp.eq.s32.totalorder %s14, 0
      %p88 = por %p86, %p87
      %p89 = scmp.ne.s32.totalorder %s75, %s76
      %p90 = scmp.eq.s32.totalorder %s15, 5
      %p91 = por %p89, %p90
      %p93 = scmp.ne.s32.totalorder %s76, %s92
      %p94 = scmp.eq.s32.totalorder %s15, 0
      %p95 = por %p93, %p94
      %s97 = sadd.s32 %s96, 1
      %p100 = scmp.eq.s32.totalorder %s9, 5
      %p101 = scmp.ne.s32.totalorder %s96, %s98
      %p102 = scmp.eq.s32.totalorder %s9, 0
      %p103 = por %p101, %p102
      %p104 = scmp.ne.s32.totalorder %s96, %s98
      %p105 = scmp.eq.s32.totalorder %s14, 5
      %p106 = por %p104, %p105
      %p107 = scmp.ne.s32.totalorder %s98, %s99
      %p108 = scmp.eq.s32.totalorder %s14, 0
      %p109 = por %p107, %p108
      %p110 = scmp.ne.s32.totalorder %s98, %s99
      %p111 = scmp.eq.s32.totalorder %s15, 5
      %p112 = por %p110, %p111
      %p114 = scmp.ne.s32.totalorder %s99, %s113
      %p115 = scmp.eq.s32.totalorder %s15, 0
      %p116 = por %p114, %p115
      %s117 = smul.u32 %s18, %s17
      %s118 = smul.u32 %s27, %s31
      %s119 = ssub.s32 %s16, %s35
      %s120 = ssub.s32 %s117, %s118
      %s121 = sor.u32 %s119, %s120
      %p122 = scmp.eq.s32.totalorder %s121, 0
      %s124 = sadd.s32 %s123, 1
      %s125 = scalar_select %p122, %s123, %s124
      %p128 = pneg %p122
      %p129 = scmp.eq.s32.totalorder %s9, 5
      %p130 = por %p128, %p129
      %p131 = scmp.ne.s32.totalorder %s123, %s126
      %p132 = scmp.eq.s32.totalorder %s9, 0
      %p133 = por %p131, %p132
      %p134 = scmp.ne.s32.totalorder %s123, %s126
      %p135 = scmp.eq.s32.totalorder %s14, 5
      %p136 = por %p134, %p135
      %p137 = scmp.ne.s32.totalorder %s126, %s127
      %p138 = scmp.eq.s32.totalorder %s14, 0
      %p139 = por %p137, %p138
      %p140 = scmp.ne.s32.totalorder %s126, %s127
      %p141 = scmp.eq.s32.totalorder %s15, 5
      %p142 = por %p140, %p141
      %p144 = scmp.ne.s32.totalorder %s127, %s143
      %p145 = scmp.eq.s32.totalorder %s15, 0
      %p146 = por %p144, %p145
      %p147 = scmp.le.s32.totalorder 1, %s9
      %p148 = scmp.lt.s32.totalorder %s9, 7
      %p149 = pnand %p147, %p148
      %p150 = pneg %p149
      // Predicated region
      $region9: #{projection_layer.1} parent=5 // pred_check
        _
      $region10: #{projection_layer.1} parent=5 // pred_check_branch
        %152 = sbr.rel (%p149) target = $region12
      $region11: #{projection_layer.1} parent=5 // pred_region
        %s153 = ssub.s32 %s9, 1
        // Predicated region
        $region13: #{projection_layer.1} parent=11 // pred_check
          %p154 = pneg %p54
        $region14: #{projection_layer.1} parent=11 // pred_check_branch
          %156 = sbr.rel (%p154) target = $region16
        $region15: #{projection_layer.1} parent=11 // pred_region
          %s157 = smul.u32 2, %s19
          %p158 = scmp.lt.s32.totalorder %s157, 1
          %s159 = scalar_select %p158, %s157, 1
          %s160 = smul.addr %s159, 8
          %s161 = scalar_lea.vmem %s0, %s160
          %s162 = smul.u32 2, %s19
        $region16: #{projection_layer.1} parent=11 // pred_fallthru
          _
        // Predicated region
        $region17: #{projection_layer.1} parent=11 // pred_check
          %p163 = pneg %p109
        $region18: #{projection_layer.1} parent=11 // pred_check_branch
          %165 = sbr.rel (%p163) target = $region20
        $region19: #{projection_layer.1} parent=11 // pred_region
          _
        $region20: #{projection_layer.1} parent=11 // pred_fallthru
          _
      $region12: #{projection_layer.1} parent=5 // pred_fallthru
        _
      %p166 = scmp.lt.s32.totalorder %s9, 6
      // Predicated region
      $region21: #{projection_layer.1} parent=5 // pred_check
        %p167 = pneg %p166
      $region22: #{projection_layer.1} parent=5 // pred_check_branch
        %169 = sbr.rel (%p167) target = $region24
      $region23: #{projection_layer.1} parent=5 // pred_region
        // Predicated region
        $region25: #{projection_layer.1} parent=23 // pred_check
          %p170 = pneg %p82
        $region26: #{projection_layer.1} parent=23 // pred_check_branch
          %172 = sbr.rel (%p170) target = $region28
        $region27: #{projection_layer.1} parent=23 // pred_region
          %s173 = sand.u32 %s72, 1
          %s174 = sand.u32 %s72, 1
          %s175 = smul.addr %s174, 16
          %s176 = scalar_lea.vmem [#allocation5], %s175
          %s177 = ssub.s32 1, %s17
          %s178 = smul.u32 %s18, %s177
          %s179 = smul.u32 %s17, 2
          %s180 = sadd.s32 %s178, %s179
          %s181 = smul.addr %s180, 4
          %s182 = scalar_lea.vmem %s1, %s181
          // Predicated region
          $region29: #{projection_layer.1} parent=27 // pred_check
            _
          $region30: #{projection_layer.1} parent=27 // pred_check_branch
            %184 = sbr.rel (0) target = $region32
          $region31: #{projection_layer.1} parent=27 // pred_region
            // Predicated region
            $region33: #{projection_layer.1} parent=31 // pred_check
              _
            $region34: #{projection_layer.1} parent=31 // pred_check_branch
              %186 = sbr.rel target = $region36
            $region35: #{projection_layer.1} parent=31 // pred_region
              // Predicated region
              $region48: #{projection_layer.1} parent=35 // pred_check
                _
              $region49: #{projection_layer.1} parent=35 // pred_check_branch
                %207 = sbr.rel (0) target = $region51
              $region50: #{projection_layer.1} parent=35 // pred_region
                loop: start=0, step=1, limit=1
                $region52: #{projection_layer.1} parent=50 // loop_pre_header
                  _
                $region53: #{projection_layer.1} parent=50 // loop_header
                  %s209 = sphi 0, %s213
                  %p210 = scmp.ge.s32.totalorder %s209, 1
                  %s214 = sphi %s182, %s182
                  %s215 = sphi %s176, %s176
                $region54: #{projection_layer.1} parent=50 // loop_header_branch
                  %212 = sbr.rel (%p210) target = $region58
                $region55: #{projection_layer.1} parent=50 // loop_body
                  _
                $region56: #{projection_layer.1} parent=50 // loop_footer
                  %s213 = sadd.s32 1, %s209
                $region57: #{projection_layer.1} parent=50 // loop_footer_branch
                  %208 = sbr.rel target = $region53
                $region58: #{projection_layer.1} parent=50 // loop_exit
                  _
                loop: start=0, step=1, limit=1
                $region59: #{projection_layer.1} parent=50 // loop_pre_header
                  _
                $region60: #{projection_layer.1} parent=50 // loop_header
                  %s218 = sphi 0, %s222
                  %p219 = scmp.ge.s32.totalorder %s218, 1
                  %s223 = sphi %s182, %s182
                  %s224 = sphi %s176, %s176
                $region61: #{projection_layer.1} parent=50 // loop_header_branch
                  %221 = sbr.rel (%p219) target = $region65
                $region62: #{projection_layer.1} parent=50 // loop_body
                  %v225 = vld [vmem:[%s223] sm:$0xf]
                  %226 = vst [vmem:[%s224] sm:$0xf] %v225
                  %v227 = vld [vmem:[%s223 + $0xc] sm:$0xf]
                  %228 = vst [vmem:[%s224 + $0x4] sm:$0xf] %v227
                  %v229 = vld [vmem:[%s223 + $0x18] sm:$0xf]
                  %230 = vst [vmem:[%s224 + $0x8] sm:$0xf] %v229
                  %v231 = vld [vmem:[%s223 + $0x24] sm:$0xf]
                  %232 = vst [vmem:[%s224 + $0xc] sm:$0xf] %v231
                $region63: #{projection_layer.1} parent=50 // loop_footer
                  %s222 = sadd.s32 1, %s218
                $region64: #{projection_layer.1} parent=50 // loop_footer_branch
                  %217 = sbr.rel target = $region60
                $region65: #{projection_layer.1} parent=50 // loop_exit
                  _
              $region51: #{projection_layer.1} parent=35 // pred_fallthru
                _
            $region36: #{projection_layer.1} parent=31 // pred_fallthru
              _
            // Predicated region
            $region37: #{projection_layer.1} parent=31 // pred_check
              _
            $region38: #{projection_layer.1} parent=31 // pred_check_branch
              %188 = sbr.rel (0) target = $region40
            $region39: #{projection_layer.1} parent=31 // pred_region
              loop: start=0, step=1, limit=1
              $region41: #{projection_layer.1} parent=39 // loop_pre_header
                _
              $region42: #{projection_layer.1} parent=39 // loop_header
                %s191 = sphi 0, %s195
                %p192 = scmp.ge.s32.totalorder %s191, 1
                %s196 = sphi %s182, %s182
                %s197 = sphi %s176, %s176
              $region43: #{projection_layer.1} parent=39 // loop_header_branch
                %194 = sbr.rel (%p192) target = $region47
              $region44: #{projection_layer.1} parent=39 // loop_body
                %v198 = vld [vmem:[%s196] sm:$0xf]
                %199 = vst [vmem:[%s197] sm:$0xf] %v198
                %v200 = vld [vmem:[%s196 + $0xc] sm:$0xf]
                %201 = vst [vmem:[%s197 + $0x4] sm:$0xf] %v200
                %v202 = vld [vmem:[%s196 + $0x18] sm:$0xf]
                %203 = vst [vmem:[%s197 + $0x8] sm:$0xf] %v202
                %v204 = vld [vmem:[%s196 + $0x24] sm:$0xf]
                %205 = vst [vmem:[%s197 + $0xc] sm:$0xf] %v204
              $region45: #{projection_layer.1} parent=39 // loop_footer
                %s195 = sadd.s32 1, %s191
              $region46: #{projection_layer.1} parent=39 // loop_footer_branch
                %190 = sbr.rel target = $region42
              $region47: #{projection_layer.1} parent=39 // loop_exit
                _
            $region40: #{projection_layer.1} parent=31 // pred_fallthru
              _
          $region32: #{projection_layer.1} parent=27 // pred_fallthru
            _
          %233 = vnop
        $region28: #{projection_layer.1} parent=23 // pred_fallthru
          _
      $region24: #{projection_layer.1} parent=5 // pred_fallthru
        _
      %p234 = scmp.le.s32.totalorder 1, %s9
      %p235 = scmp.lt.s32.totalorder %s9, 7
      %p236 = pnand %p234, %p235
      %p237 = pneg %p236
      // Predicated region
      $region66: #{projection_layer.1} parent=5 // pred_check
        _
      $region67: #{projection_layer.1} parent=5 // pred_check_branch
        %239 = sbr.rel (%p236) target = $region69
      $region68: #{projection_layer.1} parent=5 // pred_region
        %s240 = ssub.s32 %s9, 1
        %s241 = sand.u32 %s75, 1
        %s242 = sand.u32 %s75, 1
        %s243 = smul.addr %s242, 16
        %s244 = scalar_lea.vmem [#allocation5], %s243
        // Predicated region
        $region70: #{projection_layer.1} parent=68 // pred_check
          %p245 = pneg %p88
        $region71: #{projection_layer.1} parent=68 // pred_check_branch
          %247 = sbr.rel (%p245) target = $region73
        $region72: #{projection_layer.1} parent=68 // pred_region
          _
        $region73: #{projection_layer.1} parent=68 // pred_fallthru
          _
        %s248 = smul.u32 2, %s19
        %p249 = scmp.lt.s32.totalorder %s248, 1
        %s250 = scalar_select %p249, %s248, 1
        %s251 = smul.addr %s250, 8
        %s252 = scalar_lea.vmem %s0, %s251
        %p253 = pneg %p54
        %p254 = pneg %p51
        %s255 = sand.u32 %s75, 1
        %s256 = sand.u32 %s75, 1
        %s257 = smul.addr %s256, 16
        %s258 = scalar_lea.vmem [#allocation5], %s257
        %p259 = pneg %p88
        %p260 = pneg %p85
        %p261 = pneg %p109
        %p262 = pneg %p106
        %p263 = pneg %p139
        %p264 = pneg %p136
        %s265 = sand.u32 %s126, 1
        %s266 = sand.u32 %s126, 1
        %s267 = smul.addr %s266, 16
        %s268 = scalar_lea.vmem [#allocation6], %s267
        %s269 = smul.u32 2, %s19
        %p270 = scmp.lt.s32.totalorder %s269, 1
        %s271 = scalar_select %p270, %s269, 1
        %s272 = smul.addr %s271, 8
        %s273 = scalar_lea.vmem %s0, %s272
        %s274 = smul.u32 2, %s19
        %s275 = ssub.s32 1, %s20
        %s276 = smul.u32 %s21, %s275
        %s277 = smul.u32 %s20, 2
        %s278 = sadd.s32 %s276, %s277
        %s279 = smul.u32 %s21, %s20
        %s280 = smul.u32 2, %s19
        %p282 = scmp.eq.s32.totalorder %s20, 0
        %p283 = scmp.eq.s32.totalorder %s21, 0
        %p284 = pnand %p282, %p283
        %p285 = pneg %p284
        // Predicated region
        $region74: #{projection_layer.1} parent=68 // pred_check
          _
        $region75: #{projection_layer.1} parent=68 // pred_check_branch
          %287 = sbr.rel (%p284) target = $region77
        $region76: #{projection_layer.1} parent=68 // pred_region
          %vm288 = vcmask 7168
          %289 = vst.msk [vmem:[#allocation3] sm:$0xff] %vm288, -inf
          %290 = vst.msk [vmem:[#allocation3 + $0x8] sm:$0xff] %vm288, -inf
          %291 = vst.msk [vmem:[#allocation4] sm:$0xff] %vm288, 0.0
          %292 = vst.msk [vmem:[#allocation4 + $0x8] sm:$0xff] %vm288, 0.0
        $region77: #{projection_layer.1} parent=68 // pred_fallthru
          _
        // Predicated region
        $region78: #{projection_layer.1} parent=68 // pred_check
          %p293 = pneg %p282
        $region79: #{projection_layer.1} parent=68 // pred_check_branch
          %295 = sbr.rel (%p293) target = $region81
        $region80: #{projection_layer.1} parent=68 // pred_region
          %v296 = vld [vmem:[%s273] sm:$0xff]
          %v297 = vld [vmem:[%s273 + $0x8] sm:$0xff]
          %v298 = vpack.c.bf16 %v297, %v296
          %v299 = vld [vmem:[%s244] sm:$0xf]
          %v300 = vld [vmem:[%s244 + $0x4] sm:$0xf]
          %v301 = vld [vmem:[%s244 + $0x8] sm:$0xf]
          %v302 = vld [vmem:[%s244 + $0xc] sm:$0xf]
          %s303 = scalar_lea.vmem %s2, %s21
          %v304 = vld [vmem:[%s303] sm:$0x1]
          %v306 = vlaneseq
          %v307 = vshrl.u32 %v306, 7
          %v308 = vsub.s32 0, %v307
          %v309 = vrot.slane %v304, %v308
          %v315 = vunpack.c.l.b16 %v299
          %v316 = vunpack.c.l.b16 %v300
          %v317 = vunpack.c.l.b16 %v301
          %v318 = vunpack.c.l.b16 %v302
          %v319 = vpack.c.b16 %v316, %v315
          %v320 = vpack.c.b16 %v318, %v317
          %vm323 = vcmask 261120
          %v325 = vsel %vm323, %v298, 0
          %327 = vmatprep.subr.bf16.mxu0 0
          %328 = vmatpush1.bf16.msra.mxu0 %v319
          %329 = vmatprep.subr.bf16.mxu0 0
          %330 = vmatpush1.bf16.msra.mxu0 %v320
          %331 = vmatprep.subr.bf16.mxu0 0
          %332 = vmatpush1.bf16.msra.mxu0 0
          %333 = vmatprep.subr.bf16.mxu0 0
          %334 = vmatpush1.bf16.msra.mxu0 0
          %335 = vmatprep.subr.bf16.mxu0 0
          %336 = vmatpush1.bf16.msra.mxu0 0
          %337 = vmatprep.subr.bf16.mxu0 0
          %338 = vmatpush1.bf16.msra.mxu0 0
          %339 = vmatprep.subr.bf16.mxu0 0
          %340 = vmatpush1.bf16.msra.mxu0 0
          %341 = vmatprep.subr.bf16.mxu0 0
          %342 = vmatpush1.bf16.msra.mxu0 0
          %343 = vmatprep.subr.bf16.mxu0 0
          %344 = vmatpush1.bf16.msra.mxu0 0
          %345 = vmatprep.subr.bf16.mxu0 0
          %346 = vmatpush1.bf16.msra.mxu0 0
          %347 = vmatprep.subr.bf16.mxu0 0
          %348 = vmatpush1.bf16.msra.mxu0 0
          %349 = vmatprep.subr.bf16.mxu0 0
          %350 = vmatpush1.bf16.msra.mxu0 0
          %351 = vmatprep.subr.bf16.mxu0 0
          %352 = vmatpush1.bf16.msra.mxu0 0
          %353 = vmatprep.subr.bf16.mxu0 0
          %354 = vmatpush1.bf16.msra.mxu0 0
          %355 = vmatprep.subr.bf16.mxu0 0
          %356 = vmatpush1.bf16.msra.mxu0 0
          %357 = vmatprep.subr.bf16.mxu0 0
          %358 = vmatpush1.bf16.msra.mxu0 0
          %359 = vmatprep.mubr.bf16.mxu0 0
          %360 = vmatmul.mubr.bf16.gmra.mrb[0].mxu0 %v325
          %v361 = vpop.f32.mrb[0].mxu0
          %v362 = vadd.f32 %v309, %v361
          %v363 = vpop.f32.mrb[0].mxu0
          %v364 = vpop.f32.mrb[0].mxu0
          %v365 = vadd.f32 %v309, %v364
          %v366 = vpop.f32.mrb[0].mxu0
          %367 = vdwg.mxu0
          %s368 = smul.u32 %s21, 16
          %s369 = scalar_lea.vmem [#allocation2], %s368
          %370 = vst [vmem:[%s369] sm:$0xff] %v362
          %371 = vst [vmem:[%s369 + $0x8] sm:$0xff] %v365
          %v372 = vld [vmem:[#allocation3] sm:$0xff]
          %v373 = vld [vmem:[#allocation3 + $0x8] sm:$0xff]
          %374 = vmax.xlane.f32.xlu0 %v362
          %v375 = vpop.xlane.xlu0 %374
          %376 = vmax.xlane.f32.xlu0 %v365
          %v377 = vpop.xlane.xlu0 %376
          %v378 = vmax.f32 %v372, %v375
          %v379 = vmax.f32 %v373, %v377
          %v380 = vld [vmem:[#allocation4] sm:$0xff]
          %v381 = vld [vmem:[#allocation4 + $0x8] sm:$0xff]
          %v382 = vsub.f32 %v372, %v378
          %v383 = vsub.f32 %v373, %v379
          %v384 = vmul.f32 %v382, 1.442695
          %v385 = vpow.pop %v384
          %v386 = vmul.f32 %v383, 1.442695
          %v387 = vpow.pop %v386
          %v388 = vmul.f32 %v380, %v385
          %v389 = vmul.f32 %v381, %v387
          %391 = vset.pattern.permute.xlu0 0
          %392 = vperm.xlu0 %391, %v378
          %v393 = vpop.permute.xlu0 %392
          %396 = vset.pattern.permute.xlu0 0
          %397 = vperm.xlu0 %396, %v379
          %v398 = vpop.permute.xlu0 %397
          %v400 = vsub.f32 %v362, %v393
          %v401 = vsub.f32 %v365, %v398
          %v402 = vmul.f32 %v400, 1.442695
          %v403 = vpow.pop %v402
          %v404 = vmul.f32 %v401, 1.442695
          %v405 = vpow.pop %v404
          %406 = vadd.xlane.f32.xlu0 %v403
          %v407 = vpop.xlane.xlu0 %406
          %408 = vadd.xlane.f32.xlu0 %v405
          %v409 = vpop.xlane.xlu0 %408
          %v410 = vadd.f32 %v388, %v407
          %v411 = vadd.f32 %v389, %v409
          %vm412 = vcmask 7168
          %413 = vst.msk [vmem:[#allocation4] sm:$0xff] %vm412, %v410
          %414 = vst.msk [vmem:[#allocation4 + $0x8] sm:$0xff] %vm412, %v411
          %415 = vst.msk [vmem:[#allocation3] sm:$0xff] %vm412, %v378
          %416 = vst.msk [vmem:[#allocation3 + $0x8] sm:$0xff] %vm412, %v379
        $region81: #{projection_layer.1} parent=68 // pred_fallthru
          _
        %p417 = scmp.eq.s32.totalorder %s21, 2
        %p418 = pnand %p282, %p417
        %p419 = pneg %p418
        // Predicated region
        $region82: #{projection_layer.1} parent=68 // pred_check
          _
        $region83: #{projection_layer.1} parent=68 // pred_check_branch
          %421 = sbr.rel (%p418) target = $region85
        $region84: #{projection_layer.1} parent=68 // pred_region
          %v422 = vld [vmem:[#allocation3] sm:$0xff]
          %v423 = vld [vmem:[#allocation3 + $0x8] sm:$0xff]
          %v424 = vld [vmem:[#allocation4] sm:$0xff]
          %v425 = vld [vmem:[#allocation4 + $0x8] sm:$0xff]
          %v426 = vlog2.pop %v424
          %v427 = vmul.f32 %v426, 0.6931472
          %v428 = vlog2.pop %v425
          %v429 = vmul.f32 %v428, 0.6931472
          %v430 = vadd.f32 %v422, %v427
          %v431 = vadd.f32 %v423, %v429
          %vm432 = vcmask 7168
          %433 = vst.msk [vmem:[#allocation3] sm:$0xff] %vm432, %v430
          %434 = vst.msk [vmem:[#allocation3 + $0x8] sm:$0xff] %vm432, %v431
        $region85: #{projection_layer.1} parent=68 // pred_fallthru
          _
        %p435 = scmp.eq.s32.totalorder %s20, 1
        // Predicated region
        $region86: #{projection_layer.1} parent=68 // pred_check
          %p436 = pneg %p435
        $region87: #{projection_layer.1} parent=68 // pred_check_branch
          %438 = sbr.rel (%p436) target = $region89
        $region88: #{projection_layer.1} parent=68 // pred_region
          %s439 = smul.u32 %s21, 16
          %s440 = scalar_lea.vmem [#allocation2], %s439
          %v441 = vld [vmem:[%s440] sm:$0xff]
          %v442 = vld [vmem:[%s440 + $0x8] sm:$0xff]
          %v443 = vld [vmem:[#allocation3] sm:$0xff]
          %v444 = vld [vmem:[#allocation3 + $0x8] sm:$0xff]
          %446 = vset.pattern.permute.xlu0 0
          %447 = vperm.xlu0 %446, %v443
          %v448 = vpop.permute.xlu0 %447
          %451 = vset.pattern.permute.xlu0 0
          %452 = vperm.xlu0 %451, %v444
          %v453 = vpop.permute.xlu0 %452
          %v455 = vsub.f32 %v441, %v448
          %v456 = vsub.f32 %v442, %v453
          %457 = vst [vmem:[%s268] sm:$0xff] %v455
          %458 = vst [vmem:[%s268 + $0x8] sm:$0xff] %v456
        $region89: #{projection_layer.1} parent=68 // pred_fallthru
          _
        %s459 = sand.u32 %s126, 1
        %s460 = sand.u32 %s126, 1
        %s461 = smul.addr %s460, 16
        %s462 = scalar_lea.vmem [#allocation6], %s461
        // Predicated region
        $region90: #{projection_layer.1} parent=68 // pred_check
          %p463 = pneg %p136
        $region91: #{projection_layer.1} parent=68 // pred_check_branch
          %465 = sbr.rel (%p463) target = $region93
        $region92: #{projection_layer.1} parent=68 // pred_region
          %s466 = smul.u32 %s21, %s20
          %s467 = smul.u32 2, %s19
          %s468 = smul.addr %s467, 3
          %s469 = sadd.s32 %s466, %s468
          %s470 = smul.addr %s469, 8
          %s471 = scalar_lea.vmem %s3, %s470
          // Predicated region
          $region94: #{projection_layer.1} parent=92 // pred_check
            _
          $region95: #{projection_layer.1} parent=92 // pred_check_branch
            %473 = sbr.rel (0) target = $region97
          $region96: #{projection_layer.1} parent=92 // pred_region
            // Predicated region
            $region98: #{projection_layer.1} parent=96 // pred_check
              _
            $region99: #{projection_layer.1} parent=96 // pred_check_branch
              %475 = sbr.rel (0) target = $region101
            $region100: #{projection_layer.1} parent=96 // pred_region
              // Predicated region
              $region113: #{projection_layer.1} parent=100 // pred_check
                _
              $region114: #{projection_layer.1} parent=100 // pred_check_branch
                %492 = sbr.rel (0) target = $region116
              $region115: #{projection_layer.1} parent=100 // pred_region
                loop: start=0, step=1, limit=1
                $region117: #{projection_layer.1} parent=115 // loop_pre_header
                  _
                $region118: #{projection_layer.1} parent=115 // loop_header
                  %s494 = sphi 0, %s498
                  %p495 = scmp.ge.s32.totalorder %s494, 1
                  %s499 = sphi %s462, %s462
                  %s500 = sphi %s471, %s471
                $region119: #{projection_layer.1} parent=115 // loop_header_branch
                  %497 = sbr.rel (%p495) target = $region123
                $region120: #{projection_layer.1} parent=115 // loop_body
                  %v501 = vld [vmem:[%s499] sm:$0xff]
                  %502 = vst [vmem:[%s500] sm:$0xff] %v501
                  %v503 = vld [vmem:[%s499 + $0x8] sm:$0xff]
                  %504 = vst [vmem:[%s500 + $0x18] sm:$0xff] %v503
                $region121: #{projection_layer.1} parent=115 // loop_footer
                  %s498 = sadd.s32 1, %s494
                $region122: #{projection_layer.1} parent=115 // loop_footer_branch
                  %493 = sbr.rel target = $region118
                $region123: #{projection_layer.1} parent=115 // loop_exit
                  _
              $region116: #{projection_layer.1} parent=100 // pred_fallthru
                _
              // Predicated region
              $region124: #{projection_layer.1} parent=100 // pred_check
                _
              $region125: #{projection_layer.1} parent=100 // pred_check_branch
                %506 = sbr.rel target = $region127
              $region126: #{projection_layer.1} parent=100 // pred_region
                _
              $region127: #{projection_layer.1} parent=100 // pred_fallthru
                _
            $region101: #{projection_layer.1} parent=96 // pred_fallthru
              _
            // Predicated region
            $region102: #{projection_layer.1} parent=96 // pred_check
              _
            $region103: #{projection_layer.1} parent=96 // pred_check_branch
              %477 = sbr.rel target = $region105
            $region104: #{projection_layer.1} parent=96 // pred_region
              loop: start=0, step=1, limit=1
              $region106: #{projection_layer.1} parent=104 // loop_pre_header
                _
              $region107: #{projection_layer.1} parent=104 // loop_header
                %s480 = sphi 0, %s484
                %p481 = scmp.ge.s32.totalorder %s480, 1
                %s485 = sphi %s462, %s462
                %s486 = sphi %s471, %s471
              $region108: #{projection_layer.1} parent=104 // loop_header_branch
                %483 = sbr.rel (%p481) target = $region112
              $region109: #{projection_layer.1} parent=104 // loop_body
                %v487 = vld [vmem:[%s485] sm:$0xff]
                %488 = vst [vmem:[%s486] sm:$0xff] %v487
                %v489 = vld [vmem:[%s485 + $0x8] sm:$0xff]
                %490 = vst [vmem:[%s486 + $0x18] sm:$0xff] %v489
              $region110: #{projection_layer.1} parent=104 // loop_footer
                %s484 = sadd.s32 1, %s480
              $region111: #{projection_layer.1} parent=104 // loop_footer_branch
                %479 = sbr.rel target = $region107
              $region112: #{projection_layer.1} parent=104 // loop_exit
                _
            $region105: #{projection_layer.1} parent=96 // pred_fallthru
              _
          $region97: #{projection_layer.1} parent=92 // pred_fallthru
            _
          %507 = vnop
        $region93: #{projection_layer.1} parent=68 // pred_fallthru
          _
      $region69: #{projection_layer.1} parent=5 // pred_fallthru
        _
      %p508 = scmp.le.s32.totalorder 2, %s9
      // Predicated region
      $region128: #{projection_layer.1} parent=5 // pred_check
        %p509 = pneg %p508
      $region129: #{projection_layer.1} parent=5 // pred_check_branch
        %511 = sbr.rel (%p509) target = $region131
      $region130: #{projection_layer.1} parent=5 // pred_region
        %s512 = ssub.s32 %s9, 2
        // Predicated region
        $region132: #{projection_layer.1} parent=130 // pred_check
          %p513 = pneg %p142
        $region133: #{projection_layer.1} parent=130 // pred_check_branch
          %515 = sbr.rel (%p513) target = $region135
        $region134: #{projection_layer.1} parent=130 // pred_region
          %s516 = sand.u32 %s127, 1
          %s517 = sand.u32 %s127, 1
          %s518 = smul.addr %s517, 16
          %s519 = scalar_lea.vmem [#allocation6], %s518
        $region135: #{projection_layer.1} parent=130 // pred_fallthru
          _
      $region131: #{projection_layer.1} parent=5 // pred_fallthru
        _
    $region6: #{projection_layer.1} parent=1 // loop_footer
      %s13 = sadd.s32 1, %s9
    $region7: #{projection_layer.1} parent=1 // loop_footer_branch
      %8 = sbr.rel target = $region3
    $region8: #{projection_layer.1} parent=1 // loop_exit
      _

</llo_original>
